<compile_context>
chip_gen: v7x
topology: tpu7x:2x2x1
jax: 0.10.0
libtpu: 0.0.40
codegen_flags: <defaults>
</compile_context>

<pallas_src>
import functools

import jax
import jax.numpy as jnp
from jax.experimental import pallas as pl
from jax.experimental.pallas import tpu as pltpu


def _round_up(x, m):
    return (x + m - 1) // m * m


def _tpu_defaults():
    """Returns (num_parallel, vmem_capacity_bytes) for the local TPU generation."""
    try:
        kind = jax.devices()[0].device_kind.lower()
    except Exception:
        kind = ""
    dual_core = ("v7" in kind) or ("tpu7" in kind) or ("7x" in kind)
    default_cap = (64 if dual_core else 128) * 1024 * 1024
    try:
        vmem_cap = int(getattr(pltpu.get_tpu_info(), "vmem_capacity_bytes",
                               default_cap))
    except Exception:
        vmem_cap = default_cap
    return (2 if dual_core else 1), vmem_cap


def _dice_sums_kernel(pred_ref, gt_ref, inter_ref, psum_ref, gsum_ref,
                      inter_acc, psum_acc, gsum_acc, *, num_classes):
    """Grid: (parallel spatial split, reduction over spatial tiles).

    Each step reduces its (B, C, T) tile to (B, C) partial sums; the only
    per-step VMEM writes are three one-vreg accumulators.
    """
    k = pl.program_id(1)

    @pl.when(k == 0)
    def _():
        inter_acc[...] = jnp.zeros_like(inter_acc)
        psum_acc[...] = jnp.zeros_like(psum_acc)
        gsum_acc[...] = jnp.zeros_like(gsum_acc)

    p = pred_ref[...].astype(jnp.float32)     # (B, C, T) logits, upcast in VMEM
    labels = gt_ref[...]                      # (B, T) int32 labels (-1 == padding)
    T = p.shape[2]

    # softmax over the class axis (matches nn.Softmax(dim=1) on NCHW)
    m = jnp.max(p, axis=1, keepdims=True)
    e = jnp.exp(p - m)
    denom = jnp.sum(e, axis=1, keepdims=True)             # (B, 1, T)
    prob = e * pl.reciprocal(denom, approx=False)          # exact: padded pixels -> 1/C

    # in-kernel one-hot as a select (no bool->f32 cast, no extra multiply)
    cls = jax.lax.broadcasted_iota(jnp.int32, (1, num_classes, T), 1)
    eq = labels[:, None, :] == cls                          # (B, C, T) bool

    inter_acc[...] += jnp.sum(jnp.where(eq, prob, 0.0), axis=-1)
    psum_acc[...] += jnp.sum(prob, axis=-1)
    gsum_acc[...] += jnp.sum(jnp.where(eq, 1.0, 0.0), axis=-1)

    @pl.when(k == pl.num_programs(1) - 1)
    def _():
        inter_ref[...] = inter_acc[...]
        psum_ref[...] = psum_acc[...]
        gsum_ref[...] = gsum_acc[...]


def soft_dice_loss(pred, gt, class_weight=None, *, num_classes,
                   ignore_0=True, max_tile=32768, num_parallel=None,
                   smooth=1.0):
    """pred: (B, C, H, W) logits (f32 or bf16), gt: (B, H, W) int labels. Scalar loss."""
    B, C, H, W = pred.shape
    assert C == num_classes
    N = H * W

    auto_p, vmem_cap = _tpu_defaults()
    P = num_parallel if num_parallel is not None else auto_p

    pred_flat = pred.reshape(B, C, N)                    # keep native dtype in HBM
    gt_flat = gt.astype(jnp.int32).reshape(B, N)

    # Tile sizing from the per-core VMEM capacity: double-buffered pred + gt
    # tiles plus ~4 f32 temporaries of the pred tile must fit comfortably.
    pred_itemsize = jnp.dtype(pred_flat.dtype).itemsize
    bytes_per_lane = B * C * (2 * pred_itemsize + 16) + 8 * B
    vmem_budget = min(vmem_cap // 2, 64 * 1024 * 1024)
    tile_cap = max(128, (vmem_budget // bytes_per_lane) // 128 * 128)

    tile = min(max_tile, tile_cap, _round_up(pl.cdiv(N, P), 128))
    nk = pl.cdiv(N, P * tile)
    Np = P * nk * tile
    pad = Np - N
    if pad > 0:
        pred_flat = jnp.pad(pred_flat, ((0, 0), (0, 0), (0, pad)))
        gt_flat = jnp.pad(gt_flat, ((0, 0), (0, pad)), constant_values=-1)

    kernel = functools.partial(_dice_sums_kernel, num_classes=num_classes)

    sums_shape = jax.ShapeDtypeStruct((P, B, C), jnp.float32)
    out_spec = pl.BlockSpec((None, B, C), lambda p, k: (p, 0, 0))

    inter_p, psum_p, gsum_p = pl.pallas_call(
        kernel,
        out_shape=(sums_shape, sums_shape, sums_shape),
        grid_spec=pltpu.PrefetchScalarGridSpec(
            num_scalar_prefetch=0,
            grid=(P, nk),
            in_specs=[
                pl.BlockSpec((B, C, tile), lambda p, k: (0, 0, p * nk + k)),
                pl.BlockSpec((B, tile), lambda p, k: (0, p * nk + k)),
            ],
            out_specs=(out_spec, out_spec, out_spec),
            scratch_shapes=[
                pltpu.VMEM((B, C), jnp.float32),   # intersection partial
                pltpu.VMEM((B, C), jnp.float32),   # sum(prob) partial
                pltpu.VMEM((B, C), jnp.float32),   # sum(gt one-hot) partial
            ],
        ),
        compiler_params=pltpu.CompilerParams(
            dimension_semantics=("parallel", "arbitrary"),
            vmem_limit_bytes=int(min(vmem_cap * 3 // 4, 96 * 1024 * 1024)),
        ),
    )(pred_flat, gt_flat)

    # Tiny scalar epilogue in plain JAX (class_weight never enters the kernel).
    inter = jnp.sum(inter_p, axis=0)     # (B, C)
    psum = jnp.sum(psum_p, axis=0)
    gsum = jnp.sum(gsum_p, axis=0)
    if pad > 0:
        # Zero-padded logits softmax to exactly 1/C per class; label -1 keeps
        # inter/gsum clean, so only psum needs the correction.
        psum = psum - jnp.float32(pad) / jnp.float32(num_classes)

    union = psum + gsum
    dice = (2.0 * inter + smooth) / (inter + union + smooth)   # (B, C)
    mdice = jnp.mean(dice, axis=0)                             # (C,)
    loss_by_class = 1.0 - mdice

    if class_weight is None:
        class_weight = jnp.ones((num_classes,), jnp.float32)
    cw = class_weight.astype(jnp.float32)
    start = 1 if (ignore_0 and num_classes > 1) else 0
    loss = jnp.mean(loss_by_class[start:] * cw[start:])
    # NaN guard: torch replaces NaN loss with pred_prob.sum() * 0.0
    loss = jnp.where(jnp.isnan(loss), jnp.sum(psum) * 0.0, loss)
    return loss


def _reference(pred, gt, class_weight, num_classes, ignore_0=True):
    """Pure-JAX reference mirroring the torch forward (alpha=beta=1 branch)."""
    B, C, H, W = pred.shape
    prob = jax.nn.softmax(pred.astype(jnp.float32), axis=1).reshape(B, C, -1)
    gt1 = (gt[:, None] == jnp.arange(num_classes)[None, :, None, None]
           ).astype(jnp.float32).reshape(B, C, -1)
    smooth = 1.0
    inter = jnp.sum(prob * gt1, axis=2)
    union = jnp.sum(prob, axis=2) + jnp.sum(gt1, axis=2)
    dice = (2.0 * inter + smooth) / (inter + union + smooth)
    mdice = jnp.mean(dice, axis=0)
    start = 1 if (ignore_0 and num_classes > 1) else 0
    loss_by_class = 1.0 - mdice
    return jnp.mean(loss_by_class[start:] * class_weight[start:])


if __name__ == "__main__":
    key = jax.random.PRNGKey(0)
    k1, k2, k3, k4 = jax.random.split(key, 4)

    # Test 1: tile-divisible spatial size, f32 logits.
    B, C, H, W = 2, 4, 16, 16
    pred = jax.random.normal(k1, (B, C, H, W), dtype=jnp.float32)
    gt = jax.random.randint(k2, (B, H, W), 0, C, dtype=jnp.int32)
    cw = jnp.ones((C,), jnp.float32)
    loss = jax.block_until_ready(soft_dice_loss(pred, gt, cw, num_classes=C))
    ref = _reference(pred, gt, cw, C)
    assert jnp.allclose(loss, ref, rtol=1e-5, atol=1e-5), (loss, ref)

    # Test 2: non-divisible spatial size (exercises the padded tail + pad/C fixup).
    B2, C2, H2, W2 = 2, 5, 13, 13
    pred2 = jax.random.normal(k3, (B2, C2, H2, W2), dtype=jnp.float32)
    gt2 = jax.random.randint(k4, (B2, H2, W2), 0, C2, dtype=jnp.int32)
    cw2 = jnp.full((C2,), 0.5, jnp.float32)
    loss2 = jax.block_until_ready(soft_dice_loss(pred2, gt2, cw2, num_classes=C2))
    ref2 = _reference(pred2, gt2, cw2, C2)
    assert jnp.allclose(loss2, ref2, rtol=1e-5, atol=1e-5), (loss2, ref2)

    # Test 3: bf16 logits kept bf16 in HBM, upcast in-kernel.
    pred3 = pred2.astype(jnp.bfloat16)
    loss3 = jax.block_until_ready(soft_dice_loss(pred3, gt2, cw2, num_classes=C2))
    ref3 = _reference(pred3.astype(jnp.float32), gt2, cw2, C2)
    assert jnp.allclose(loss3, ref3, rtol=1e-4, atol=1e-4), (loss3, ref3)

    # Test 4: forced num_parallel=2 with padding that spans multiple blocks
    # (one block entirely padding) — validates the P>1 path on any generation.
    B4, C4, H4, W4 = 2, 3, 7, 7
    kp, kg = jax.random.split(jax.random.PRNGKey(1))
    pred4 = jax.random.normal(kp, (B4, C4, H4, W4), dtype=jnp.float32)
    gt4 = jax.random.randint(kg, (B4, H4, W4), 0, C4, dtype=jnp.int32)
    cw4 = jnp.array([1.0, 2.0, 0.5], jnp.float32)
    loss4 = jax.block_until_ready(
        soft_dice_loss(pred4, gt4, cw4, num_classes=C4, num_parallel=2))
    ref4 = _reference(pred4, gt4, cw4, C4)
    assert jnp.allclose(loss4, ref4, rtol=1e-5, atol=1e-5), (loss4, ref4)

    print("KERNEL_OK")
</pallas_src>

<mosaic_0001>
module attributes {stable_mosaic.version = 11 : i64} {
  func.func @_dice_sums_kernel(%arg0: i32, %arg1: i32, %arg2: memref<2x4x256xf32, #tpu.memory_space<vmem>>, %arg3: memref<2x256xi32, #tpu.memory_space<vmem>>, %arg4: memref<1x2x4xf32, #tpu.memory_space<vmem>>, %arg5: memref<1x2x4xf32, #tpu.memory_space<vmem>>, %arg6: memref<1x2x4xf32, #tpu.memory_space<vmem>>, %arg7: memref<2x4xf32, #tpu.memory_space<vmem>>, %arg8: memref<2x4xf32, #tpu.memory_space<vmem>>, %arg9: memref<2x4xf32, #tpu.memory_space<vmem>>) attributes {dimension_semantics = [#tpu.dimension_semantics<parallel>, #tpu.dimension_semantics<arbitrary>], iteration_bounds = array<i64: 1, 1>, scalar_prefetch = 0 : i64, scratch_operands = 3 : i64, tpu.core_type = #tpu.core_type<tc>, window_params = [{transform_indices = @transform_0, window_bounds = array<i64: 2, 4, 256>}, {transform_indices = @transform_1, window_bounds = array<i64: 2, 256>}, {transform_indices = @transform_2, window_bounds = array<i64: 1, 2, 4>}, {transform_indices = @transform_3, window_bounds = array<i64: 1, 2, 4>}, {transform_indices = @transform_4, window_bounds = array<i64: 1, 2, 4>}]} {
    %c0_i32 = arith.constant 0 : i32
    %0 = arith.cmpi eq, %arg1, %c0_i32 : i32
    %1 = arith.extui %0 : i1 to i32
    %c0_i32_0 = arith.constant 0 : i32
    %2 = arith.cmpi ne, %1, %c0_i32_0 : i32
    scf.if %2 {
      %cst_26 = arith.constant 0.000000e+00 : f32
      %40 = vector.broadcast %cst_26 : f32 to vector<2x4xf32>
      %c0_27 = arith.constant 0 : index
      %c0_28 = arith.constant 0 : index
      %41 = vector.load %arg7[%c0_27, %c0_28] : memref<2x4xf32, #tpu.memory_space<vmem>>, vector<2x4xf32>
      tpu.vector_store %arg7[%c0_27, %c0_28], %40 {strides = array<i32>} : memref<2x4xf32, #tpu.memory_space<vmem>>, vector<2x4xf32>,
      %cst_29 = arith.constant 0.000000e+00 : f32
      %42 = vector.broadcast %cst_29 : f32 to vector<2x4xf32>
      %c0_30 = arith.constant 0 : index
      %c0_31 = arith.constant 0 : index
      %43 = vector.load %arg8[%c0_30, %c0_31] : memref<2x4xf32, #tpu.memory_space<vmem>>, vector<2x4xf32>
      tpu.vector_store %arg8[%c0_30, %c0_31], %42 {strides = array<i32>} : memref<2x4xf32, #tpu.memory_space<vmem>>, vector<2x4xf32>,
      %cst_32 = arith.constant 0.000000e+00 : f32
      %44 = vector.broadcast %cst_32 : f32 to vector<2x4xf32>
      %c0_33 = arith.constant 0 : index
      %c0_34 = arith.constant 0 : index
      %45 = vector.load %arg9[%c0_33, %c0_34] : memref<2x4xf32, #tpu.memory_space<vmem>>, vector<2x4xf32>
      tpu.vector_store %arg9[%c0_33, %c0_34], %44 {strides = array<i32>} : memref<2x4xf32, #tpu.memory_space<vmem>>, vector<2x4xf32>,
    } else {
    }
    %c0 = arith.constant 0 : index
    %c0_1 = arith.constant 0 : index
    %c0_2 = arith.constant 0 : index
    %3 = vector.load %arg2[%c0, %c0_1, %c0_2] : memref<2x4x256xf32, #tpu.memory_space<vmem>>, vector<2x4x256xf32>
    %c0_3 = arith.constant 0 : index
    %c0_4 = arith.constant 0 : index
    %4 = vector.load %arg3[%c0_3, %c0_4] : memref<2x256xi32, #tpu.memory_space<vmem>>, vector<2x256xi32>
    %cst = arith.constant dense<0xFF800000> : vector<2x256xf32>
    %5 = vector.multi_reduction <maximumf>, %3, %cst [1] : vector<2x4x256xf32> to vector<2x256xf32>
    %6 = vector.shape_cast %5 : vector<2x256xf32> to vector<2x1x256xf32>
    %7 = vector.broadcast %6 : vector<2x1x256xf32> to vector<2x4x256xf32>
    %8 = arith.subf %3, %7 : vector<2x4x256xf32>
    %9 = math.exp %8 : vector<2x4x256xf32>
    %cst_5 = arith.constant dense<0.000000e+00> : vector<2x256xf32>
    %10 = vector.multi_reduction <add>, %9, %cst_5 [1] : vector<2x4x256xf32> to vector<2x256xf32>
    %11 = vector.shape_cast %10 : vector<2x256xf32> to vector<2x1x256xf32>
    %12 = tpu.reciprocal %11 : vector<2x1x256xf32> -> vector<2x1x256xf32>
    %13 = vector.broadcast %12 : vector<2x1x256xf32> to vector<2x4x256xf32>
    %14 = arith.mulf %9, %13 : vector<2x4x256xf32>
    %15 = tpu.iota {dimensions = array<i32: 1>} : vector<1x4x256xi32>
    %16 = vector.shape_cast %4 : vector<2x256xi32> to vector<2x1x256xi32>
    %17 = vector.broadcast %16 : vector<2x1x256xi32> to vector<2x4x256xi32>
    %18 = vector.broadcast %15 : vector<1x4x256xi32> to vector<2x4x256xi32>
    %19 = arith.cmpi eq, %17, %18 : vector<2x4x256xi32>
    %c0_6 = arith.constant 0 : index
    %c0_7 = arith.constant 0 : index
    %20 = vector.load %arg7[%c0_6, %c0_7] : memref<2x4xf32, #tpu.memory_space<vmem>>, vector<2x4xf32>
    %cst_8 = arith.constant 0.000000e+00 : f32
    %21 = vector.broadcast %cst_8 : f32 to vector<2x4x256xf32>
    %22 = arith.select %19, %14, %21 : vector<2x4x256xi1>, vector<2x4x256xf32>
    %cst_9 = arith.constant dense<0.000000e+00> : vector<2x4xf32>
    %23 = vector.multi_reduction <add>, %22, %cst_9 [2] : vector<2x4x256xf32> to vector<2x4xf32>
    %24 = arith.addf %20, %23 : vector<2x4xf32>
    %c0_10 = arith.constant 0 : index
    %c0_11 = arith.constant 0 : index
    %25 = vector.load %arg7[%c0_10, %c0_11] : memref<2x4xf32, #tpu.memory_space<vmem>>, vector<2x4xf32>
    tpu.vector_store %arg7[%c0_10, %c0_11], %24 {strides = array<i32>} : memref<2x4xf32, #tpu.memory_space<vmem>>, vector<2x4xf32>,
    %c0_12 = arith.constant 0 : index
    %c0_13 = arith.constant 0 : index
    %26 = vector.load %arg8[%c0_12, %c0_13] : memref<2x4xf32, #tpu.memory_space<vmem>>, vector<2x4xf32>
    %cst_14 = arith.constant dense<0.000000e+00> : vector<2x4xf32>
    %27 = vector.multi_reduction <add>, %14, %cst_14 [2] : vector<2x4x256xf32> to vector<2x4xf32>
    %28 = arith.addf %26, %27 : vector<2x4xf32>
    %c0_15 = arith.constant 0 : index
    %c0_16 = arith.constant 0 : index
    %29 = vector.load %arg8[%c0_15, %c0_16] : memref<2x4xf32, #tpu.memory_space<vmem>>, vector<2x4xf32>
    tpu.vector_store %arg8[%c0_15, %c0_16], %28 {strides = array<i32>} : memref<2x4xf32, #tpu.memory_space<vmem>>, vector<2x4xf32>,
    %c0_17 = arith.constant 0 : index
    %c0_18 = arith.constant 0 : index
    %30 = vector.load %arg9[%c0_17, %c0_18] : memref<2x4xf32, #tpu.memory_space<vmem>>, vector<2x4xf32>
    %cst_19 = arith.constant 1.000000e+00 : f32
    %cst_20 = arith.constant 0.000000e+00 : f32
    %31 = vector.broadcast %cst_19 : f32 to vector<2x4x256xf32>
    %32 = vector.broadcast %cst_20 : f32 to vector<2x4x256xf32>
    %33 = arith.select %19, %31, %32 : vector<2x4x256xi1>, vector<2x4x256xf32>
    %cst_21 = arith.constant dense<0.000000e+00> : vector<2x4xf32>
    %34 = vector.multi_reduction <add>, %33, %cst_21 [2] : vector<2x4x256xf32> to vector<2x4xf32>
    %35 = arith.addf %30, %34 : vector<2x4xf32>
    %c0_22 = arith.constant 0 : index
    %c0_23 = arith.constant 0 : index
    %36 = vector.load %arg9[%c0_22, %c0_23] : memref<2x4xf32, #tpu.memory_space<vmem>>, vector<2x4xf32>
    tpu.vector_store %arg9[%c0_22, %c0_23], %35 {strides = array<i32>} : memref<2x4xf32, #tpu.memory_space<vmem>>, vector<2x4xf32>,
    %c0_i32_24 = arith.constant 0 : i32
    %37 = arith.cmpi eq, %arg1, %c0_i32_24 : i32
    %38 = arith.extui %37 : i1 to i32
    %c0_i32_25 = arith.constant 0 : i32
    %39 = arith.cmpi ne, %38, %c0_i32_25 : i32
    scf.if %39 {
      %c0_26 = arith.constant 0 : index
      %c0_27 = arith.constant 0 : index
      %40 = vector.load %arg7[%c0_26, %c0_27] : memref<2x4xf32, #tpu.memory_space<vmem>>, vector<2x4xf32>
      %c0_28 = arith.constant 0 : index
      %c0_29 = arith.constant 0 : index
      %c0_30 = arith.constant 0 : index
      %41 = vector.load %arg4[%c0_28, %c0_29, %c0_30] : memref<1x2x4xf32, #tpu.memory_space<vmem>>, vector<1x2x4xf32>
      %42 = vector.shape_cast %41 : vector<1x2x4xf32> to vector<2x4xf32>
      %43 = vector.shape_cast %40 : vector<2x4xf32> to vector<1x2x4xf32>
      tpu.vector_store %arg4[%c0_28, %c0_29, %c0_30], %43 {strides = array<i32>} : memref<1x2x4xf32, #tpu.memory_space<vmem>>, vector<1x2x4xf32>,
      %c0_31 = arith.constant 0 : index
      %c0_32 = arith.constant 0 : index
      %44 = vector.load %arg8[%c0_31, %c0_32] : memref<2x4xf32, #tpu.memory_space<vmem>>, vector<2x4xf32>
      %c0_33 = arith.constant 0 : index
      %c0_34 = arith.constant 0 : index
      %c0_35 = arith.constant 0 : index
      %45 = vector.load %arg5[%c0_33, %c0_34, %c0_35] : memref<1x2x4xf32, #tpu.memory_space<vmem>>, vector<1x2x4xf32>
      %46 = vector.shape_cast %45 : vector<1x2x4xf32> to vector<2x4xf32>
      %47 = vector.shape_cast %44 : vector<2x4xf32> to vector<1x2x4xf32>
      tpu.vector_store %arg5[%c0_33, %c0_34, %c0_35], %47 {strides = array<i32>} : memref<1x2x4xf32, #tpu.memory_space<vmem>>, vector<1x2x4xf32>,
      %c0_36 = arith.constant 0 : index
      %c0_37 = arith.constant 0 : index
      %48 = vector.load %arg9[%c0_36, %c0_37] : memref<2x4xf32, #tpu.memory_space<vmem>>, vector<2x4xf32>
      %c0_38 = arith.constant 0 : index
      %c0_39 = arith.constant 0 : index
      %c0_40 = arith.constant 0 : index
      %49 = vector.load %arg6[%c0_38, %c0_39, %c0_40] : memref<1x2x4xf32, #tpu.memory_space<vmem>>, vector<1x2x4xf32>
      %50 = vector.shape_cast %49 : vector<1x2x4xf32> to vector<2x4xf32>
      %51 = vector.shape_cast %48 : vector<2x4xf32> to vector<1x2x4xf32>
      tpu.vector_store %arg6[%c0_38, %c0_39, %c0_40], %51 {strides = array<i32>} : memref<1x2x4xf32, #tpu.memory_space<vmem>>, vector<1x2x4xf32>,
    } else {
    }
    return
  }
  func.func @transform_0(%arg0: i32, %arg1: i32) -> (i32, i32, i32) {
    %c1_i32 = arith.constant 1 : i32
    %0 = arith.muli %arg0, %c1_i32 : i32
    %1 = arith.addi %0, %arg1 : i32
    %c0_i32 = arith.constant 0 : i32
    %c0_i32_0 = arith.constant 0 : i32
    %c0_i32_1 = arith.constant 0 : i32
    return %c0_i32, %c0_i32_0, %1 : i32, i32, i32
  }
  func.func @transform_1(%arg0: i32, %arg1: i32) -> (i32, i32) {
    %c1_i32 = arith.constant 1 : i32
    %0 = arith.muli %arg0, %c1_i32 : i32
    %1 = arith.addi %0, %arg1 : i32
    %c0_i32 = arith.constant 0 : i32
    %c0_i32_0 = arith.constant 0 : i32
    return %c0_i32, %1 : i32, i32
  }
  func.func @transform_2(%arg0: i32, %arg1: i32) -> (i32, i32, i32) {
    %c0_i32 = arith.constant 0 : i32
    %c0_i32_0 = arith.constant 0 : i32
    %c0_i32_1 = arith.constant 0 : i32
    return %arg0, %c0_i32, %c0_i32_0 : i32, i32, i32
  }
  func.func @transform_3(%arg0: i32, %arg1: i32) -> (i32, i32, i32) {
    %c0_i32 = arith.constant 0 : i32
    %c0_i32_0 = arith.constant 0 : i32
    %c0_i32_1 = arith.constant 0 : i32
    return %arg0, %c0_i32, %c0_i32_0 : i32, i32, i32
  }
  func.func @transform_4(%arg0: i32, %arg1: i32) -> (i32, i32, i32) {
    %c0_i32 = arith.constant 0 : i32
    %c0_i32_0 = arith.constant 0 : i32
    %c0_i32_1 = arith.constant 0 : i32
    return %arg0, %c0_i32, %c0_i32_0 : i32, i32, i32
  }
}

</mosaic_0001>

<llo_original>
// kernel: tpu_custom_call.1
$region0: #{tpu_custom_call.1}
  #allocation0 [shape = 'u32[]', space=smem, size = 0x4, offset = 0x4, fixed_abs, tag = 'smem constant byte address 0x4 - core index']
  #allocation1 [shape = 'u32[144,128]{1,0:T(1,128)}', space=vmem, size = 0x12000, scoped, tag = 'internal scratch']
  #allocation2 [shape = 'f32[2,4]{1,0:T(2,128)}', space=vmem, size = 0x400, scoped, tag = 'scratch operand']
  #allocation3 [shape = 'f32[2,4]{1,0:T(2,128)}', space=vmem, size = 0x400, scoped, tag = 'scratch operand']
  #allocation4 [shape = 'f32[2,4]{1,0:T(2,128)}', space=vmem, size = 0x400, scoped, tag = 'scratch operand']
  %s0 = inlined_call_operand.hbm [shape: f32[2,4,256], index: 0, kind: input, shape index: {}]
  %s1 = inlined_call_operand.hbm [shape: s32[2,256], index: 1, kind: input, shape index: {}]
  %s2 = inlined_call_operand.hbm [shape: f32[1,2,4], index: 2, kind: output, shape index: {0}]
  %s3 = inlined_call_operand.hbm [shape: f32[1,2,4], index: 3, kind: output, shape index: {1}]
  %s4 = inlined_call_operand.hbm [shape: f32[1,2,4], index: 4, kind: output, shape index: {2}]
  %5 = xla_tuple %s2, %s3, %s4
  %s6 = sld [smem:[#allocation0]]
  $region50: #{tpu_custom_call.1} parent=0
    _
  %s8 = ssub.s32 1, %s6
  %s9 = scalar_select 0, %s8, %s6
  $region1: #{tpu_custom_call.1} parent=0
    #allocation5 [shape = 'u8[8192]{0}', space=vmem, size = 0x2000, scoped, tag = 'input window, operand 0, single buffered']
    #allocation6 [shape = 's32[1]{0}', space=sflag, size = 0x4, scoped, tag = 'scoped memory for tpu_custom_call.1']
    #allocation7 [shape = 's32[1]{0}', space=sflag, size = 0x4, scoped, tag = 'scoped memory for tpu_custom_call.1']
    #allocation8 [shape = 'u8[2048]{0}', space=vmem, size = 0x800, scoped, tag = 'input window, operand 1, single buffered']
    #allocation9 [shape = 's32[1]{0}', space=sflag, size = 0x4, scoped, tag = 'scoped memory for tpu_custom_call.1']
    #allocation10 [shape = 'u8[1024]{0}', space=vmem, size = 0x400, scoped, tag = 'output window, operand 0, single buffered']
    #allocation11 [shape = 'u8[1024]{0}', space=vmem, size = 0x400, scoped, tag = 'output window, operand 1, single buffered']
    #allocation12 [shape = 's32[1]{0}', space=sflag, size = 0x4, scoped, tag = 'scoped memory for tpu_custom_call.1']
    #allocation13 [shape = 'u8[1024]{0}', space=vmem, size = 0x400, scoped, tag = 'output window, operand 2, single buffered']
    %10 = vsyncpa [#allocation6], 0
    %11 = vsyncpa [#allocation9], 0
    %12 = vsyncpa [#allocation7], 0
    %13 = vsyncpa [#allocation12], 0
    // Predicated region
    $region2: #{tpu_custom_call.1} parent=1 // pred_check
      _
    $region3: #{tpu_custom_call.1} parent=1 // pred_check_branch
      %15 = sbr.rel (0) target = $region5
    $region4: #{tpu_custom_call.1} parent=1 // pred_region
      %s16 = sadd.s32 0, 0
      %s17 = smul.u32 2, %s16
      %s19 = ssub.s32 256, 256
      %20 = vsyncadd [#allocation6], %s19
      %s21 = smul.addr %s17, 64
      %s22 = scalar_lea.hbm %s0, %s21
      %s23 = sshll.u32 [#allocation5], 4
      %s24 = int_to_ptr.vmem [resolvable:$true] %s23
      %29 = dma.hbm_to_vmem [thread:$0]  %s22, 256, %s24, [#allocation6], 128, 128, 8
    $region5: #{tpu_custom_call.1} parent=1 // pred_fallthru
      _
    // Predicated region
    $region6: #{tpu_custom_call.1} parent=1 // pred_check
      _
    $region7: #{tpu_custom_call.1} parent=1 // pred_check_branch
      %31 = sbr.rel (0) target = $region9
    $region8: #{tpu_custom_call.1} parent=1 // pred_region
      %s32 = sadd.s32 0, 0
      %s33 = smul.u32 2, %s32
      %s35 = ssub.s32 64, 64
      %36 = vsyncadd [#allocation9], %s35
      %s37 = smul.addr %s33, 32
      %s38 = scalar_lea.hbm %s1, %s37
      %s40 = sshll.u32 [#allocation8], 4
      %s41 = int_to_ptr.vmem [resolvable:$true] %s40
      %43 = dma.hbm_to_vmem [thread:$0]  %s38, 64, %s41, [#allocation9]
    $region9: #{tpu_custom_call.1} parent=1 // pred_fallthru
      _
    // Predicated region
    $region10: #{tpu_custom_call.1} parent=1 // pred_check
      _
    $region11: #{tpu_custom_call.1} parent=1 // pred_check_branch
      %45 = sbr.rel (0) target = $region13
    $region12: #{tpu_custom_call.1} parent=1 // pred_region
      %46 = dma.done [#allocation6], 256
    $region13: #{tpu_custom_call.1} parent=1 // pred_fallthru
      _
    // Predicated region
    $region14: #{tpu_custom_call.1} parent=1 // pred_check
      _
    $region15: #{tpu_custom_call.1} parent=1 // pred_check_branch
      %48 = sbr.rel (0) target = $region17
    $region16: #{tpu_custom_call.1} parent=1 // pred_region
      %49 = dma.done [#allocation9], 64
    $region17: #{tpu_custom_call.1} parent=1 // pred_fallthru
      _
    %s50 = sadd.s32 0, 0
    %s51 = smul.u32 2, %s50
    %s52 = sadd.s32 0, 0
    %s53 = smul.u32 2, %s52
    %p54 = scmp.eq.s32.totalorder 0, 0
    // Predicated region
    $region18: #{tpu_custom_call.1} parent=1 // pred_check
      %p55 = pneg %p54
    $region19: #{tpu_custom_call.1} parent=1 // pred_check_branch
      %57 = sbr.rel (%p55) target = $region21
    $region20: #{tpu_custom_call.1} parent=1 // pred_region
      %vm58 = vcmask 25600
      %59 = vst.msk [vmem:[#allocation2] sm:$0x3] %vm58, 0.0
      %60 = vst.msk [vmem:[#allocation3] sm:$0x3] %vm58, 0.0
      %61 = vst.msk [vmem:[#allocation4] sm:$0x3] %vm58, 0.0
    $region21: #{tpu_custom_call.1} parent=1 // pred_fallthru
      _
    %v62 = vld [vmem:[#allocation5] sm:$0xff]
    %v63 = vld [vmem:[#allocation5 + $0x8] sm:$0xff]
    %v64 = vld [vmem:[#allocation8] sm:$0xf]
    %v67 = vcombine.high %v62, %v62
    %v68 = vcombine.high %v63, %v63
    %vm71 = vcmask 1043456
    %v72 = vsel %vm71, %v62, -inf
    %v73 = vrot.slane %v72, 4
    %v74 = vmax.f32 %v72, %v73
    %v75 = vrot.slane %v74, 2
    %v76 = vmax.f32 %v74, %v75
    %v77 = vrot.slane %v76, 1
    %v78 = vmax.f32 %v76, %v77
    %v79 = vsel %vm71, %v67, -inf
    %v80 = vrot.slane %v79, 4
    %v81 = vmax.f32 %v79, %v80
    %v82 = vrot.slane %v81, 2
    %v83 = vmax.f32 %v81, %v82
    %v84 = vrot.slane %v83, 1
    %v85 = vmax.f32 %v83, %v84
    %v86 = vsel %vm71, %v63, -inf
    %v87 = vrot.slane %v86, 4
    %v88 = vmax.f32 %v86, %v87
    %v89 = vrot.slane %v88, 2
    %v90 = vmax.f32 %v88, %v89
    %v91 = vrot.slane %v90, 1
    %v92 = vmax.f32 %v90, %v91
    %v93 = vsel %vm71, %v68, -inf
    %v94 = vrot.slane %v93, 4
    %v95 = vmax.f32 %v93, %v94
    %v96 = vrot.slane %v95, 2
    %v97 = vmax.f32 %v95, %v96
    %v98 = vrot.slane %v97, 1
    %v99 = vmax.f32 %v97, %v98
    %v104 = vcombine.low %v78, %v85
    %v105 = vcombine.low %v92, %v99
    %v108 = vsub.f32 %v62, %v104
    %v109 = vsub.f32 %v63, %v105
    %v110 = vmul.f32 %v108, 1.442695
    %v111 = vpow.pop %v110
    %v112 = vmul.f32 %v109, 1.442695
    %v113 = vpow.pop %v112
    %v116 = vcombine.high %v111, %v111
    %v117 = vcombine.high %v113, %v113
    %v120 = vsel %vm71, %v111, 0.0
    %v121 = vrot.slane %v120, 4
    %v122 = vadd.f32 %v120, %v121
    %v123 = vrot.slane %v122, 2
    %v124 = vadd.f32 %v122, %v123
    %v125 = vrot.slane %v124, 1
    %v126 = vadd.f32 %v124, %v125
    %v127 = vsel %vm71, %v116, 0.0
    %v128 = vrot.slane %v127, 4
    %v129 = vadd.f32 %v127, %v128
    %v130 = vrot.slane %v129, 2
    %v131 = vadd.f32 %v129, %v130
    %v132 = vrot.slane %v131, 1
    %v133 = vadd.f32 %v131, %v132
    %v134 = vsel %vm71, %v113, 0.0
    %v135 = vrot.slane %v134, 4
    %v136 = vadd.f32 %v134, %v135
    %v137 = vrot.slane %v136, 2
    %v138 = vadd.f32 %v136, %v137
    %v139 = vrot.slane %v138, 1
    %v140 = vadd.f32 %v138, %v139
    %v141 = vsel %vm71, %v117, 0.0
    %v142 = vrot.slane %v141, 4
    %v143 = vadd.f32 %v141, %v142
    %v144 = vrot.slane %v143, 2
    %v145 = vadd.f32 %v143, %v144
    %v146 = vrot.slane %v145, 1
    %v147 = vadd.f32 %v145, %v146
    %v148 = vrcp.pop %v126
    %v149 = vrcp.pop %v133
    %v150 = vrcp.pop %v140
    %v151 = vrcp.pop %v147
    %v156 = vcombine.low %v148, %v149
    %v157 = vcombine.low %v150, %v151
    %v160 = vmul.f32 %v111, %v156
    %v161 = vmul.f32 %v113, %v157
    %v162 = vlaneseq
    %v163 = vshrl.u32 %v162, 7
    %v165 = vunpack.c.l.s4 1966171168
    %v166 = vunpack.c.0.s8 %v165
    %v167 = vlaneseq
    %v168 = vshrl.u32 %v167, 7
    %v169 = vsub.s32 %v166, %v168
    %v170 = vrot.slane %v64, %v169
    %v171 = vcombine.high %v170, %v170
    %v172 = vlaneseq
    %v173 = vshrl.u32 %v172, 7
    %v174 = vsub.s32 0, %v173
    %v175 = vrot.slane %v170, %v174
    %v176 = vlaneseq
    %v177 = vshrl.u32 %v176, 7
    %v178 = vsub.s32 1, %v177
    %v179 = vrot.slane %v170, %v178
    %v180 = vlaneseq
    %v181 = vshrl.u32 %v180, 7
    %v182 = vsub.s32 0, %v181
    %v183 = vrot.slane %v171, %v182
    %v184 = vlaneseq
    %v185 = vshrl.u32 %v184, 7
    %v186 = vsub.s32 1, %v185
    %v187 = vrot.slane %v171, %v186
    %vm188 = vcmp.eq.s32.totalorder %v175, %v163
    %vm189 = vcmp.eq.s32.totalorder %v179, %v163
    %vm190 = vcmp.eq.s32.totalorder %v183, %v163
    %vm191 = vcmp.eq.s32.totalorder %v187, %v163
    %v192 = vld [vmem:[#allocation2] sm:$0x3]
    %v195 = vcombine.high %v160, %v160
    %v196 = vcombine.high %v161, %v161
    %v199 = vsel %vm188, %v160, 0.0
    %v200 = vsel %vm189, %v195, 0.0
    %v201 = vsel %vm190, %v161, 0.0
    %v202 = vsel %vm191, %v196, 0.0
    %v203 = vsel %vm71, %v199, 0.0
    %v204 = vsel %vm71, %v200, 0.0
    %v205 = vadd.f32 %v203, %v204
    %206 = vadd.xlane.f32.xlu0 %v205
    %v207 = vpop.xlane.xlu0 %206
    %v208 = vsel %vm71, %v201, 0.0
    %v209 = vsel %vm71, %v202, 0.0
    %v210 = vadd.f32 %v208, %v209
    %211 = vadd.xlane.f32.xlu0 %v210
    %v212 = vpop.xlane.xlu0 %211
    %v215 = vlaneseq
    %v216 = vand.u32 %v215, 127
    %v217 = vlaneseq
    %v218 = vshrl.u32 %v217, 7
    %v219 = vsub.s32 %v216, %v218
    %v220 = vrot.slane %v207, %v219
    %v221 = vlaneseq
    %v222 = vshrl.u32 %v221, 7
    %v223 = vsub.s32 %v216, %v222
    %v224 = vrot.slane %v212, %v223
    %vm225 = vcmask 1041409
    %v226 = vsel %vm225, %v224, %v220
    %v228 = vadd.f32 %v192, %v226
    %vm229 = vcmask 25600
    %230 = vst.msk [vmem:[#allocation2] sm:$0x3] %vm229, %v228
    %v231 = vld [vmem:[#allocation3] sm:$0x3]
    %v232 = vsel %vm71, %v160, 0.0
    %v233 = vsel %vm71, %v195, 0.0
    %v234 = vadd.f32 %v232, %v233
    %235 = vadd.xlane.f32.xlu0 %v234
    %v236 = vpop.xlane.xlu0 %235
    %v237 = vsel %vm71, %v161, 0.0
    %v238 = vsel %vm71, %v196, 0.0
    %v239 = vadd.f32 %v237, %v238
    %240 = vadd.xlane.f32.xlu0 %v239
    %v241 = vpop.xlane.xlu0 %240
    %v244 = vlaneseq
    %v245 = vshrl.u32 %v244, 7
    %v246 = vsub.s32 %v216, %v245
    %v247 = vrot.slane %v236, %v246
    %v248 = vlaneseq
    %v249 = vshrl.u32 %v248, 7
    %v250 = vsub.s32 %v216, %v249
    %v251 = vrot.slane %v241, %v250
    %v252 = vsel %vm225, %v251, %v247
    %v254 = vadd.f32 %v231, %v252
    %255 = vst.msk [vmem:[#allocation3] sm:$0x3] %vm229, %v254
    %v256 = vld [vmem:[#allocation4] sm:$0x3]
    %v257 = vsel %vm188, 1.0, 0.0
    %v258 = vsel %vm189, 1.0, 0.0
    %v259 = vsel %vm190, 1.0, 0.0
    %v260 = vsel %vm191, 1.0, 0.0
    %v261 = vsel %vm71, %v257, 0.0
    %v262 = vsel %vm71, %v258, 0.0
    %v263 = vadd.f32 %v261, %v262
    %264 = vadd.xlane.f32.xlu0 %v263
    %v265 = vpop.xlane.xlu0 %264
    %v266 = vsel %vm71, %v259, 0.0
    %v267 = vsel %vm71, %v260, 0.0
    %v268 = vadd.f32 %v266, %v267
    %269 = vadd.xlane.f32.xlu0 %v268
    %v270 = vpop.xlane.xlu0 %269
    %v273 = vlaneseq
    %v274 = vshrl.u32 %v273, 7
    %v275 = vsub.s32 %v216, %v274
    %v276 = vrot.slane %v265, %v275
    %v277 = vlaneseq
    %v278 = vshrl.u32 %v277, 7
    %v279 = vsub.s32 %v216, %v278
    %v280 = vrot.slane %v270, %v279
    %v281 = vsel %vm225, %v280, %v276
    %v283 = vadd.f32 %v256, %v281
    %284 = vst.msk [vmem:[#allocation4] sm:$0x3] %vm229, %v283
    // Predicated region
    $region22: #{tpu_custom_call.1} parent=1 // pred_check
      %p285 = pneg %p54
    $region23: #{tpu_custom_call.1} parent=1 // pred_check_branch
      %287 = sbr.rel (%p285) target = $region25
    $region24: #{tpu_custom_call.1} parent=1 // pred_region
      %v288 = vld [vmem:[#allocation2] sm:$0x3]
      %289 = vst.msk [vmem:[#allocation10] sm:$0x3] %vm229, %v288
      %v290 = vld [vmem:[#allocation3] sm:$0x3]
      %291 = vst.msk [vmem:[#allocation11] sm:$0x3] %vm229, %v290
      %v292 = vld [vmem:[#allocation4] sm:$0x3]
      %293 = vst.msk [vmem:[#allocation13] sm:$0x3] %vm229, %v292
    $region25: #{tpu_custom_call.1} parent=1 // pred_fallthru
      _
    // Predicated region
    $region26: #{tpu_custom_call.1} parent=1 // pred_check
      _
    $region27: #{tpu_custom_call.1} parent=1 // pred_check_branch
      %295 = sbr.rel (0) target = $region29
    $region28: #{tpu_custom_call.1} parent=1 // pred_region
      %s297 = ssub.s32 32, 32
      %298 = vsyncadd [#allocation7], %s297
      %s300 = sshll.u32 [#allocation10], 4
      %s301 = int_to_ptr.vmem [resolvable:$true] %s300
      %303 = dma.vmem_to_hbm [thread:$0]  %s301, 32, %s2, [#allocation7]
    $region29: #{tpu_custom_call.1} parent=1 // pred_fallthru
      _
    // Predicated region
    $region30: #{tpu_custom_call.1} parent=1 // pred_check
      _
    $region31: #{tpu_custom_call.1} parent=1 // pred_check_branch
      %305 = sbr.rel (0) target = $region33
    $region32: #{tpu_custom_call.1} parent=1 // pred_region
      %s307 = ssub.s32 32, 32
      %308 = vsyncadd [#allocation12], %s307
      %s310 = sshll.u32 [#allocation11], 4
      %s311 = int_to_ptr.vmem [resolvable:$true] %s310
      %313 = dma.vmem_to_hbm [thread:$0]  %s311, 32, %s3, [#allocation12]
    $region33: #{tpu_custom_call.1} parent=1 // pred_fallthru
      _
    // Predicated region
    $region34: #{tpu_custom_call.1} parent=1 // pred_check
      _
    $region35: #{tpu_custom_call.1} parent=1 // pred_check_branch
      %315 = sbr.rel (0) target = $region37
    $region36: #{tpu_custom_call.1} parent=1 // pred_region
      %s317 = ssub.s32 32, 32
      %318 = vsyncadd [#allocation12], %s317
      %s320 = sshll.u32 [#allocation13], 4
      %s321 = int_to_ptr.vmem [resolvable:$true] %s320
      %323 = dma.vmem_to_hbm [thread:$0]  %s321, 32, %s4, [#allocation12]
    $region37: #{tpu_custom_call.1} parent=1 // pred_fallthru
      _
    // Predicated region
    $region38: #{tpu_custom_call.1} parent=1 // pred_check
      _
    $region39: #{tpu_custom_call.1} parent=1 // pred_check_branch
      %325 = sbr.rel (0) target = $region41
    $region40: #{tpu_custom_call.1} parent=1 // pred_region
      %326 = dma.done [#allocation7], 32
    $region41: #{tpu_custom_call.1} parent=1 // pred_fallthru
      _
    // Predicated region
    $region42: #{tpu_custom_call.1} parent=1 // pred_check
      _
    $region43: #{tpu_custom_call.1} parent=1 // pred_check_branch
      %328 = sbr.rel (0) target = $region45
    $region44: #{tpu_custom_call.1} parent=1 // pred_region
      %329 = dma.done [#allocation12], 32
    $region45: #{tpu_custom_call.1} parent=1 // pred_fallthru
      _
    // Predicated region
    $region46: #{tpu_custom_call.1} parent=1 // pred_check
      _
    $region47: #{tpu_custom_call.1} parent=1 // pred_check_branch
      %331 = sbr.rel (0) target = $region49
    $region48: #{tpu_custom_call.1} parent=1 // pred_region
      %332 = dma.done [#allocation12], 32
    $region49: #{tpu_custom_call.1} parent=1 // pred_fallthru
      _
    %333 = vsyncpa [#allocation6], 1
    %334 = vsyncpa [#allocation9], 1
    %335 = vsyncpa [#allocation7], 1
    %336 = vsyncpa [#allocation12], 1

</llo_original>
